<compile_context>
chip_gen: v7x
topology: tpu7x:2x2x1
jax: 0.10.0
libtpu: 0.0.40
codegen_flags: <defaults>
</compile_context>

<pallas_src>
import functools

import jax
import jax.numpy as jnp
from jax import lax
from jax.experimental import pallas as pl
from jax.experimental.pallas import tpu as pltpu

_NEG_BIG = -1e30  # finite "-inf": avoids inf-inf NaNs in the online max update


def _round_up(x, m):
    return (x + m - 1) // m * m


# --------------------------------------------------------------------------
# Shared per-tile helpers (all f32 post-matmul math; v5e-safe).
# --------------------------------------------------------------------------
def _init_accumulators(m_ref, d_ref, ps_ref, pc_ref):
    m_ref[...] = jnp.full_like(m_ref, _NEG_BIG)
    d_ref[...] = jnp.zeros_like(d_ref)
    ps_ref[...] = jnp.zeros_like(ps_ref)
    pc_ref[...] = jnp.zeros_like(pc_ref)


def _scores_and_contrib(anc_ref, con_ref, inv_temp, n_valid, tm, tn):
    """Scaled scores (TM, TN) and the boolean 'valid non-self column' mask."""
    i = pl.program_id(0)
    j = pl.program_id(1)
    # NT matmul: contract the last dims of both operands (no transpose copy).
    adc = lax.dot_general(
        anc_ref[...], con_ref[...],
        dimension_numbers=(((1,), (1,)), ((), ())),
        preferred_element_type=jnp.float32) * inv_temp
    row_ids = i * tm + lax.broadcasted_iota(jnp.int32, (tm, tn), 0)
    col_ids = j * tn + lax.broadcasted_iota(jnp.int32, (tm, tn), 1)
    # Self-exclusion and column-padding validity share the same iotas.
    contrib = jnp.logical_and(row_ids != col_ids, col_ids < n_valid)
    return adc, contrib


def _lse_update(adc, contrib, m_ref, d_ref):
    """Online logsumexp over valid non-self columns (flash-style)."""
    s = jnp.where(contrib, adc, _NEG_BIG)
    m_old = m_ref[...]
    m_new = jnp.maximum(m_old, jnp.max(s, axis=1, keepdims=True))
    d_ref[...] = (jnp.exp(m_old - m_new) * d_ref[...]
                  + jnp.sum(jnp.exp(s - m_new), axis=1, keepdims=True))
    m_ref[...] = m_new


def _finalize(out_ref, m_ref, d_ref, ps_ref, pc_ref):
    # sum_pos(log_prob) = sum_pos(adc) - (m + log(sum exp(adc - m))) * pcnt
    log_z = m_ref[...] + jnp.log(d_ref[...])
    out_ref[:, 0:1] = ps_ref[...] - log_z * pc_ref[...]
    out_ref[:, 1:2] = pc_ref[...]


# --------------------------------------------------------------------------
# Kernels.
# --------------------------------------------------------------------------
def _supcon_labels_kernel(rlab_ref, clab_ref, anc_ref, con_ref, out_ref,
                          m_ref, d_ref, ps_ref, pc_ref,
                          *, inv_temp, n_valid, tm, tn):
    # rlab_ref: (TM, 1) int32 anchor-row pseudo-labels
    # clab_ref: (1, TN) int32 contrast-column pseudo-labels
    # anc_ref:  (TM, D_pad), con_ref: (TN, D_pad) features (bf16 or f32)
    j = pl.program_id(1)

    @pl.when(j == 0)
    def _():
        _init_accumulators(m_ref, d_ref, ps_ref, pc_ref)

    adc, contrib = _scores_and_contrib(anc_ref, con_ref, inv_temp, n_valid, tm, tn)
    _lse_update(adc, contrib, m_ref, d_ref)

    # Positive pairs: same label, valid, non-self.  Boolean predicate + where
    # (no f32 mask materialization, no mask multiplies).
    pos = jnp.logical_and(contrib, rlab_ref[...] == clab_ref[...])
    ps_ref[...] += jnp.sum(jnp.where(pos, adc, 0.0), axis=1, keepdims=True)
    pc_ref[...] += jnp.sum(jnp.where(pos, 1.0, 0.0), axis=1, keepdims=True)

    @pl.when(j == pl.num_programs(1) - 1)
    def _():
        _finalize(out_ref, m_ref, d_ref, ps_ref, pc_ref)


def _supcon_mask_kernel(mask_ref, anc_ref, con_ref, out_ref,
                        m_ref, d_ref, ps_ref, pc_ref,
                        *, inv_temp, n_valid, tm, tn):
    # mask_ref: (TM, TN) bf16 block of the tiled user-provided mask (weights).
    j = pl.program_id(1)

    @pl.when(j == 0)
    def _():
        _init_accumulators(m_ref, d_ref, ps_ref, pc_ref)

    adc, contrib = _scores_and_contrib(anc_ref, con_ref, inv_temp, n_valid, tm, tn)
    _lse_update(adc, contrib, m_ref, d_ref)

    w = jnp.where(contrib, mask_ref[...].astype(jnp.float32), 0.0)
    ps_ref[...] += jnp.sum(w * adc, axis=1, keepdims=True)
    pc_ref[...] += jnp.sum(w, axis=1, keepdims=True)

    @pl.when(j == pl.num_programs(1) - 1)
    def _():
        _finalize(out_ref, m_ref, d_ref, ps_ref, pc_ref)


# --------------------------------------------------------------------------
# Wrapper.
# --------------------------------------------------------------------------
def supcon_loss(features, labels=None, mask=None, *, temperature=0.07,
                contrast_mode="all", base_temperature=0.07,
                block_rows=256, block_cols=None,
                vmem_budget_bytes=40 * 2 ** 20, mxu_dtype=jnp.bfloat16):
    """JAX/Pallas equivalent of SupConLoss.forward (contrast_mode='all').

    features: [bsz, n_views, ...]; labels: optional [bsz]; mask: optional
    [bsz, bsz].  block_rows: anchor rows per step (256 for v6e/v7x's 256x256
    MXU; use 128 on v5e).  block_cols: contrast columns per step (None = auto
    from vmem_budget_bytes; raise the budget on 128 MiB v5e/v6e parts).
    mxu_dtype: MXU operand dtype (bf16 default; f32 for bit-faithful parity).
    Returns a scalar f32 loss.  Rows with zero positives yield 0/0 -> NaN,
    matching the PyTorch reference.
    """
    if features.ndim < 3:
        raise ValueError("`features` needs to be [bsz, n_views, ...]")
    if features.ndim > 3:
        features = features.reshape(features.shape[0], features.shape[1], -1)
    bsz, n_views, dim = features.shape
    if labels is not None and mask is not None:
        raise ValueError("Cannot define both `labels` and `mask`")
    if contrast_mode != "all":
        # TODO(synk): contrast_mode='one' needs a rectangular [bsz, N] anchor set.
        raise NotImplementedError("Pallas kernel implemented for contrast_mode='all'")

    n = n_views * bsz
    # torch.cat(torch.unbind(features, dim=1), dim=0) == transpose(1,0,2).reshape
    contrast_feature = jnp.transpose(features, (1, 0, 2)).reshape(n, dim)

    # --- tiling / layout ---
    itemsize = jnp.dtype(mxu_dtype).itemsize
    # Align TM (and hence row offsets) to the sublane packing granularity of
    # every operand whose sublane dim is TM (bf16 packs 2 rows per sublane).
    row_align = max(16, 32 // itemsize)
    tm = _round_up(min(block_rows, n), row_align)
    d_pad = _round_up(dim, 128)                      # lane-align the contraction dim
    n_pad_r = _round_up(n, tm)
    grid_r = n_pad_r // tm
    # NOTE: on v7x prefer tile choices giving an even grid_r >= 2 so the
    # "parallel" row axis shards evenly across the 2 TensorCores.

    # Column tile: keep the whole contrast set in one block (features fetched
    # from HBM exactly once) while the per-step footprint fits the budget;
    # otherwise tile columns and accumulate with the online softmax.
    mask_itemsize = 2 if mask is not None else 0
    fixed = 2 * tm * d_pad * itemsize + (1 << 16)          # anchors (x2 buffers) + slack
    per_col = (2 * d_pad * itemsize                        # contrast block (x2 buffers)
               + 2 * tm * mask_itemsize                    # streamed mask block (x2)
               + 6 * tm * 4)                               # f32/i32 tile temporaries
    tn_full = _round_up(n, 128)
    if block_cols is not None:
        tn = _round_up(min(block_cols, tn_full), 128)
    else:
        tn = max(128, int((vmem_budget_bytes - fixed) // per_col) // 128 * 128)
        tn = min(tn_full, tn)
    n_pad_c = _round_up(n, tn)
    grid_c = n_pad_c // tn

    # VMEM limit sized from the actual footprint (never clamped below it).
    est = fixed + tn * per_col + 8 * tm * 4 + 4 * (tm + tn) * 4
    vmem_limit = int(min(100 * 2 ** 20, max(32 * 2 ** 20, est + 16 * 2 ** 20)))

    cf = contrast_feature.astype(mxu_dtype)
    anchors = jnp.pad(cf, ((0, n_pad_r - n), (0, d_pad - dim)))
    contrast = jnp.pad(cf, ((0, n_pad_c - n), (0, d_pad - dim)))

    inv_temp = float(1.0 / temperature)
    # NOTE: this reference module does NOT rescale by temperature/base_temperature;
    # `base_temperature` is kept only for API parity.

    compiler_params = pltpu.CompilerParams(
        dimension_semantics=("parallel", "arbitrary"),   # rows parallel, reduction last
        vmem_limit_bytes=vmem_limit)

    out_shape = jax.ShapeDtypeStruct((n_pad_r, 2), jnp.float32)  # [psum, pcnt] per row
    out_spec = pl.BlockSpec((tm, 2), lambda i, j: (i, 0))
    anc_spec = pl.BlockSpec((tm, d_pad), lambda i, j: (i, 0))
    # TODO(synk): when grid_c == 1 this block is constant; pl.Buffered(1) would
    # halve its allocation (it is already accounted for in the budget).
    con_spec = pl.BlockSpec((tn, d_pad), lambda i, j: (j, 0))
    scratch = [pltpu.VMEM((tm, 1), jnp.float32) for _ in range(4)]  # m, denom, psum, pcnt

    if mask is None:
        # SimCLR (labels=None -> identity classes) or supervised (labels) path:
        # the positive mask is rebuilt in-kernel from O(N) pseudo-labels.
        if labels is None:
            lab = jnp.arange(bsz, dtype=jnp.int32)
        else:
            lab = jnp.asarray(labels, dtype=jnp.int32).reshape(-1)
            if lab.shape[0] != bsz:
                raise ValueError("Num of labels does not match num of features")
        row_lab = jnp.tile(lab, n_views)                              # (N,)
        rlab = jnp.pad(row_lab, (0, n_pad_r - n)).reshape(n_pad_r, 1)
        clab = jnp.pad(row_lab, (0, n_pad_c - n)).reshape(1, n_pad_c)

        kernel = functools.partial(_supcon_labels_kernel, inv_temp=inv_temp,
                                   n_valid=n, tm=tm, tn=tn)
        out = pl.pallas_call(
            kernel,
            out_shape=out_shape,
            grid_spec=pltpu.PrefetchScalarGridSpec(
                num_scalar_prefetch=0,
                grid=(grid_r, grid_c),
                in_specs=[pl.BlockSpec((tm, 1), lambda i, j: (i, 0)),    # row labels
                          pl.BlockSpec((1, tn), lambda i, j: (0, j)),    # col labels
                          anc_spec, con_spec],
                out_specs=out_spec,
                scratch_shapes=scratch),
            compiler_params=compiler_params,
        )(rlab, clab, anchors, contrast)
    else:
        # Explicit-mask fallback: the mask cannot be label-encoded, so stream
        # it as bf16 column blocks (exact for 0/1 masks; halves HBM bytes).
        base = jnp.asarray(mask, dtype=jnp.float32)
        full = jnp.tile(base, (n_views, n_views)).astype(jnp.bfloat16)
        full = jnp.pad(full, ((0, n_pad_r - n), (0, n_pad_c - n)))

        kernel = functools.partial(_supcon_mask_kernel, inv_temp=inv_temp,
                                   n_valid=n, tm=tm, tn=tn)
        out = pl.pallas_call(
            kernel,
            out_shape=out_shape,
            grid_spec=pltpu.PrefetchScalarGridSpec(
                num_scalar_prefetch=0,
                grid=(grid_r, grid_c),
                in_specs=[pl.BlockSpec((tm, tn), lambda i, j: (i, j)),   # mask block
                          anc_spec, con_spec],
                out_specs=out_spec,
                scratch_shapes=scratch),
            compiler_params=compiler_params,
        )(full, anchors, contrast)

    # Tiny final reduction in plain JAX (matches reference: no pos-count guard).
    psum = out[:n, 0]
    pcnt = out[:n, 1]
    # loss = -mean_log_prob_pos ; .view(anchor_count, bsz).mean() == global mean
    return -jnp.mean(psum / pcnt)


# --------------------------------------------------------------------------
# Pure-JAX f32 reference (mirrors the PyTorch module) for verification.
# --------------------------------------------------------------------------
def _supcon_loss_ref(features, labels=None, *, temperature=0.07):
    bsz, n_views, dim = features.shape
    if labels is None:
        mask = jnp.eye(bsz, dtype=jnp.float32)
    else:
        labels = labels.reshape(-1, 1)
        mask = (labels == labels.T).astype(jnp.float32)
    contrast_feature = jnp.transpose(features, (1, 0, 2)).reshape(
        n_views * bsz, dim).astype(jnp.float32)
    anchor_feature = contrast_feature
    anchor_count = contrast_count = n_views
    adc = (anchor_feature @ contrast_feature.T) / temperature
    logits = adc - jnp.max(adc, axis=1, keepdims=True)
    mask = jnp.tile(mask, (anchor_count, contrast_count))
    n = anchor_count * bsz
    logits_mask = 1.0 - jnp.eye(n, dtype=jnp.float32)
    mask = mask * logits_mask
    exp_logits = jnp.exp(logits) * logits_mask
    log_prob = logits - jnp.log(exp_logits.sum(1, keepdims=True))
    mean_log_prob_pos = (mask * log_prob).sum(1) / mask.sum(1)
    return (-mean_log_prob_pos).reshape(anchor_count, bsz).mean()


if __name__ == "__main__":
    key = jax.random.PRNGKey(0)
    k1, k2, k3, k4 = jax.random.split(key, 4)

    # --- Small case: bsz=8, n_views=2, dim=32 (single tile on each axis). ---
    bsz, n_views, dim = 8, 2, 32
    feats = jax.random.normal(k1, (bsz, n_views, dim), dtype=jnp.float32)
    feats = feats / jnp.linalg.norm(feats, axis=-1, keepdims=True)
    labels = jax.random.randint(k2, (bsz,), 0, 4)

    ref_unsup = _supcon_loss_ref(feats)
    ref_sup = _supcon_loss_ref(feats, labels=labels)

    loss_unsup = jax.block_until_ready(supcon_loss(feats, mxu_dtype=jnp.float32))
    loss_sup = jax.block_until_ready(
        supcon_loss(feats, labels=labels, mxu_dtype=jnp.float32))
    eq_mask = (labels[:, None] == labels[None, :]).astype(jnp.float32)
    loss_mask = jax.block_until_ready(
        supcon_loss(feats, mask=eq_mask, mxu_dtype=jnp.float32))
    loss_bf16 = jax.block_until_ready(supcon_loss(feats, labels=labels))  # default bf16 MXU

    assert jnp.allclose(loss_unsup, ref_unsup, rtol=1e-4, atol=1e-4), (loss_unsup, ref_unsup)
    assert jnp.allclose(loss_sup, ref_sup, rtol=1e-4, atol=1e-4), (loss_sup, ref_sup)
    assert jnp.allclose(loss_mask, ref_sup, rtol=1e-4, atol=1e-4), (loss_mask, ref_sup)
    assert jnp.allclose(loss_bf16, ref_sup, rtol=5e-2, atol=5e-2), (loss_bf16, ref_sup)

    # --- Tiled case: multiple row blocks, >1 online-softmax column blocks,
    # and padded rows/columns.  n = 140 -> grid = (9, 2) with tm=16, tn=128. ---
    bsz2, n_views2, dim2 = 70, 2, 40
    feats2 = jax.random.normal(k3, (bsz2, n_views2, dim2), dtype=jnp.float32)
    feats2 = feats2 / jnp.linalg.norm(feats2, axis=-1, keepdims=True)
    labels2 = jax.random.randint(k4, (bsz2,), 0, 10)

    ref2 = _supcon_loss_ref(feats2, labels=labels2)
    loss2 = jax.block_until_ready(
        supcon_loss(feats2, labels=labels2, block_rows=16, block_cols=128,
                    mxu_dtype=jnp.float32))
    eq_mask2 = (labels2[:, None] == labels2[None, :]).astype(jnp.float32)
    loss2_mask = jax.block_until_ready(
        supcon_loss(feats2, mask=eq_mask2, block_rows=16, block_cols=128,
                    mxu_dtype=jnp.float32))

    assert jnp.allclose(loss2, ref2, rtol=2e-4, atol=2e-4), (loss2, ref2)
    assert jnp.allclose(loss2_mask, ref2, rtol=2e-4, atol=2e-4), (loss2_mask, ref2)

    print("KERNEL_OK")
</pallas_src>

<mosaic_0001>
module attributes {stable_mosaic.version = 11 : i64} {
  func.func @_supcon_labels_kernel(%arg0: i32, %arg1: i32, %arg2: memref<16x1xi32, #tpu.memory_space<vmem>>, %arg3: memref<1x128xi32, #tpu.memory_space<vmem>>, %arg4: memref<16x128xf32, #tpu.memory_space<vmem>>, %arg5: memref<128x128xf32, #tpu.memory_space<vmem>>, %arg6: memref<16x2xf32, #tpu.memory_space<vmem>>, %arg7: memref<16x1xf32, #tpu.memory_space<vmem>>, %arg8: memref<16x1xf32, #tpu.memory_space<vmem>>, %arg9: memref<16x1xf32, #tpu.memory_space<vmem>>, %arg10: memref<16x1xf32, #tpu.memory_space<vmem>>) attributes {dimension_semantics = [#tpu.dimension_semantics<parallel>, #tpu.dimension_semantics<arbitrary>], iteration_bounds = array<i64: 1, 1>, scalar_prefetch = 0 : i64, scratch_operands = 4 : i64, tpu.core_type = #tpu.core_type<tc>, window_params = [{transform_indices = @transform_0, window_bounds = array<i64: 16, 1>}, {transform_indices = @transform_1, window_bounds = array<i64: 1, 128>}, {transform_indices = @transform_2, window_bounds = array<i64: 16, 128>}, {transform_indices = @transform_3, window_bounds = array<i64: 128, 128>}, {transform_indices = @transform_4, window_bounds = array<i64: 16, 2>}]} {
    %c0_i32 = arith.constant 0 : i32
    %0 = arith.cmpi eq, %arg1, %c0_i32 : i32
    %1 = arith.extui %0 : i1 to i32
    %c0_i32_0 = arith.constant 0 : i32
    %2 = arith.cmpi ne, %1, %c0_i32_0 : i32
    scf.if %2 {
      %cst_36 = arith.constant -1.000000e+30 : f32
      %62 = vector.broadcast %cst_36 : f32 to vector<16x1xf32>
      %c0_37 = arith.constant 0 : index
      %c0_38 = arith.constant 0 : index
      %63 = vector.load %arg7[%c0_37, %c0_38] : memref<16x1xf32, #tpu.memory_space<vmem>>, vector<16x1xf32>
      tpu.vector_store %arg7[%c0_37, %c0_38], %62 {strides = array<i32>} : memref<16x1xf32, #tpu.memory_space<vmem>>, vector<16x1xf32>,
      %cst_39 = arith.constant 0.000000e+00 : f32
      %64 = vector.broadcast %cst_39 : f32 to vector<16x1xf32>
      %c0_40 = arith.constant 0 : index
      %c0_41 = arith.constant 0 : index
      %65 = vector.load %arg8[%c0_40, %c0_41] : memref<16x1xf32, #tpu.memory_space<vmem>>, vector<16x1xf32>
      tpu.vector_store %arg8[%c0_40, %c0_41], %64 {strides = array<i32>} : memref<16x1xf32, #tpu.memory_space<vmem>>, vector<16x1xf32>,
      %cst_42 = arith.constant 0.000000e+00 : f32
      %66 = vector.broadcast %cst_42 : f32 to vector<16x1xf32>
      %c0_43 = arith.constant 0 : index
      %c0_44 = arith.constant 0 : index
      %67 = vector.load %arg9[%c0_43, %c0_44] : memref<16x1xf32, #tpu.memory_space<vmem>>, vector<16x1xf32>
      tpu.vector_store %arg9[%c0_43, %c0_44], %66 {strides = array<i32>} : memref<16x1xf32, #tpu.memory_space<vmem>>, vector<16x1xf32>,
      %cst_45 = arith.constant 0.000000e+00 : f32
      %68 = vector.broadcast %cst_45 : f32 to vector<16x1xf32>
      %c0_46 = arith.constant 0 : index
      %c0_47 = arith.constant 0 : index
      %69 = vector.load %arg10[%c0_46, %c0_47] : memref<16x1xf32, #tpu.memory_space<vmem>>, vector<16x1xf32>
      tpu.vector_store %arg10[%c0_46, %c0_47], %68 {strides = array<i32>} : memref<16x1xf32, #tpu.memory_space<vmem>>, vector<16x1xf32>,
    } else {
    }
    %c0 = arith.constant 0 : index
    %c0_1 = arith.constant 0 : index
    %3 = vector.load %arg4[%c0, %c0_1] : memref<16x128xf32, #tpu.memory_space<vmem>>, vector<16x128xf32>
    %c0_2 = arith.constant 0 : index
    %c0_3 = arith.constant 0 : index
    %4 = vector.load %arg5[%c0_2, %c0_3] : memref<128x128xf32, #tpu.memory_space<vmem>>, vector<128x128xf32>
    %cst = arith.constant dense<0.000000e+00> : vector<16x128xf32>
    %5 = tpu.matmul %3, %4, %cst {dimension_numbers = #tpu.dot_dimension_numbers<[1], [1], [0], [0], [0, 0, 1, 0], [], []>} : vector<16x128xf32>, vector<128x128xf32>, vector<16x128xf32> -> vector<16x128xf32>
    %cst_4 = arith.constant 14.2857141 : f32
    %6 = vector.broadcast %cst_4 : f32 to vector<16x128xf32>
    %7 = arith.mulf %5, %6 : vector<16x128xf32>
    %c16_i32 = arith.constant 16 : i32
    %8 = arith.muli %arg0, %c16_i32 : i32
    %9 = tpu.iota {dimensions = array<i32: 0>} : vector<16x128xi32>
    %10 = vector.broadcast %8 : i32 to vector<16x128xi32>
    %11 = arith.addi %10, %9 : vector<16x128xi32>
    %c128_i32 = arith.constant 128 : i32
    %12 = arith.muli %arg1, %c128_i32 : i32
    %13 = tpu.iota {dimensions = array<i32: 1>} : vector<16x128xi32>
    %14 = vector.broadcast %12 : i32 to vector<16x128xi32>
    %15 = arith.addi %14, %13 : vector<16x128xi32>
    %16 = arith.cmpi ne, %11, %15 : vector<16x128xi32>
    %c16_i32_5 = arith.constant 16 : i32
    %17 = vector.broadcast %c16_i32_5 : i32 to vector<16x128xi32>
    %18 = arith.cmpi slt, %15, %17 : vector<16x128xi32>
    %19 = arith.andi %16, %18 : vector<16x128xi1>
    %cst_6 = arith.constant -1.000000e+30 : f32
    %20 = vector.broadcast %cst_6 : f32 to vector<16x128xf32>
    %21 = arith.select %19, %7, %20 : vector<16x128xi1>, vector<16x128xf32>
    %c0_7 = arith.constant 0 : index
    %c0_8 = arith.constant 0 : index
    %22 = vector.load %arg7[%c0_7, %c0_8] : memref<16x1xf32, #tpu.memory_space<vmem>>, vector<16x1xf32>
    %cst_9 = arith.constant dense<0xFF800000> : vector<16xf32>
    %23 = vector.multi_reduction <maximumf>, %21, %cst_9 [1] : vector<16x128xf32> to vector<16xf32>
    %24 = vector.shape_cast %23 : vector<16xf32> to vector<16x1xf32>
    %25 = arith.maximumf %22, %24 : vector<16x1xf32>
    %26 = arith.subf %22, %25 : vector<16x1xf32>
    %27 = math.exp %26 : vector<16x1xf32>
    %c0_10 = arith.constant 0 : index
    %c0_11 = arith.constant 0 : index
    %28 = vector.load %arg8[%c0_10, %c0_11] : memref<16x1xf32, #tpu.memory_space<vmem>>, vector<16x1xf32>
    %29 = arith.mulf %27, %28 : vector<16x1xf32>
    %30 = vector.broadcast %25 : vector<16x1xf32> to vector<16x128xf32>
    %31 = arith.subf %21, %30 : vector<16x128xf32>
    %32 = math.exp %31 : vector<16x128xf32>
    %cst_12 = arith.constant dense<0.000000e+00> : vector<16xf32>
    %33 = vector.multi_reduction <add>, %32, %cst_12 [1] : vector<16x128xf32> to vector<16xf32>
    %34 = vector.shape_cast %33 : vector<16xf32> to vector<16x1xf32>
    %35 = arith.addf %29, %34 : vector<16x1xf32>
    %c0_13 = arith.constant 0 : index
    %c0_14 = arith.constant 0 : index
    %36 = vector.load %arg8[%c0_13, %c0_14] : memref<16x1xf32, #tpu.memory_space<vmem>>, vector<16x1xf32>
    tpu.vector_store %arg8[%c0_13, %c0_14], %35 {strides = array<i32>} : memref<16x1xf32, #tpu.memory_space<vmem>>, vector<16x1xf32>,
    %c0_15 = arith.constant 0 : index
    %c0_16 = arith.constant 0 : index
    %37 = vector.load %arg7[%c0_15, %c0_16] : memref<16x1xf32, #tpu.memory_space<vmem>>, vector<16x1xf32>
    tpu.vector_store %arg7[%c0_15, %c0_16], %25 {strides = array<i32>} : memref<16x1xf32, #tpu.memory_space<vmem>>, vector<16x1xf32>,
    %c0_17 = arith.constant 0 : index
    %c0_18 = arith.constant 0 : index
    %38 = vector.load %arg2[%c0_17, %c0_18] : memref<16x1xi32, #tpu.memory_space<vmem>>, vector<16x1xi32>
    %c0_19 = arith.constant 0 : index
    %c0_20 = arith.constant 0 : index
    %39 = vector.load %arg3[%c0_19, %c0_20] : memref<1x128xi32, #tpu.memory_space<vmem>>, vector<1x128xi32>
    %40 = vector.broadcast %38 : vector<16x1xi32> to vector<16x128xi32>
    %41 = vector.broadcast %39 : vector<1x128xi32> to vector<16x128xi32>
    %42 = arith.cmpi eq, %40, %41 : vector<16x128xi32>
    %43 = arith.andi %19, %42 : vector<16x128xi1>
    %c0_21 = arith.constant 0 : index
    %c0_22 = arith.constant 0 : index
    %44 = vector.load %arg9[%c0_21, %c0_22] : memref<16x1xf32, #tpu.memory_space<vmem>>, vector<16x1xf32>
    %cst_23 = arith.constant 0.000000e+00 : f32
    %45 = vector.broadcast %cst_23 : f32 to vector<16x128xf32>
    %46 = arith.select %43, %7, %45 : vector<16x128xi1>, vector<16x128xf32>
    %cst_24 = arith.constant dense<0.000000e+00> : vector<16xf32>
    %47 = vector.multi_reduction <add>, %46, %cst_24 [1] : vector<16x128xf32> to vector<16xf32>
    %48 = vector.shape_cast %47 : vector<16xf32> to vector<16x1xf32>
    %49 = arith.addf %44, %48 : vector<16x1xf32>
    %c0_25 = arith.constant 0 : index
    %c0_26 = arith.constant 0 : index
    %50 = vector.load %arg9[%c0_25, %c0_26] : memref<16x1xf32, #tpu.memory_space<vmem>>, vector<16x1xf32>
    tpu.vector_store %arg9[%c0_25, %c0_26], %49 {strides = array<i32>} : memref<16x1xf32, #tpu.memory_space<vmem>>, vector<16x1xf32>,
    %c0_27 = arith.constant 0 : index
    %c0_28 = arith.constant 0 : index
    %51 = vector.load %arg10[%c0_27, %c0_28] : memref<16x1xf32, #tpu.memory_space<vmem>>, vector<16x1xf32>
    %cst_29 = arith.constant 1.000000e+00 : f32
    %cst_30 = arith.constant 0.000000e+00 : f32
    %52 = vector.broadcast %cst_29 : f32 to vector<16x128xf32>
    %53 = vector.broadcast %cst_30 : f32 to vector<16x128xf32>
    %54 = arith.select %43, %52, %53 : vector<16x128xi1>, vector<16x128xf32>
    %cst_31 = arith.constant dense<0.000000e+00> : vector<16xf32>
    %55 = vector.multi_reduction <add>, %54, %cst_31 [1] : vector<16x128xf32> to vector<16xf32>
    %56 = vector.shape_cast %55 : vector<16xf32> to vector<16x1xf32>
    %57 = arith.addf %51, %56 : vector<16x1xf32>
    %c0_32 = arith.constant 0 : index
    %c0_33 = arith.constant 0 : index
    %58 = vector.load %arg10[%c0_32, %c0_33] : memref<16x1xf32, #tpu.memory_space<vmem>>, vector<16x1xf32>
    tpu.vector_store %arg10[%c0_32, %c0_33], %57 {strides = array<i32>} : memref<16x1xf32, #tpu.memory_space<vmem>>, vector<16x1xf32>,
    %c0_i32_34 = arith.constant 0 : i32
    %59 = arith.cmpi eq, %arg1, %c0_i32_34 : i32
    %60 = arith.extui %59 : i1 to i32
    %c0_i32_35 = arith.constant 0 : i32
    %61 = arith.cmpi ne, %60, %c0_i32_35 : i32
    scf.if %61 {
      %c0_36 = arith.constant 0 : index
      %c0_37 = arith.constant 0 : index
      %62 = vector.load %arg7[%c0_36, %c0_37] : memref<16x1xf32, #tpu.memory_space<vmem>>, vector<16x1xf32>
      %c0_38 = arith.constant 0 : index
      %c0_39 = arith.constant 0 : index
      %63 = vector.load %arg8[%c0_38, %c0_39] : memref<16x1xf32, #tpu.memory_space<vmem>>, vector<16x1xf32>
      %64 = math.log %63 : vector<16x1xf32>
      %65 = arith.addf %62, %64 : vector<16x1xf32>
      %c0_40 = arith.constant 0 : index
      %c0_41 = arith.constant 0 : index
      %66 = vector.load %arg9[%c0_40, %c0_41] : memref<16x1xf32, #tpu.memory_space<vmem>>, vector<16x1xf32>
      %c0_42 = arith.constant 0 : index
      %c0_43 = arith.constant 0 : index
      %67 = vector.load %arg10[%c0_42, %c0_43] : memref<16x1xf32, #tpu.memory_space<vmem>>, vector<16x1xf32>
      %68 = arith.mulf %65, %67 : vector<16x1xf32>
      %69 = arith.subf %66, %68 : vector<16x1xf32>
      %c0_44 = arith.constant 0 : index
      %c0_45 = arith.constant 0 : index
      %70 = vector.load %arg6[%c0_44, %c0_45] : memref<16x2xf32, #tpu.memory_space<vmem>>, vector<16x1xf32>
      tpu.vector_store %arg6[%c0_44, %c0_45], %69 {strides = array<i32>} : memref<16x2xf32, #tpu.memory_space<vmem>>, vector<16x1xf32>,
      %c0_46 = arith.constant 0 : index
      %c0_47 = arith.constant 0 : index
      %71 = vector.load %arg10[%c0_46, %c0_47] : memref<16x1xf32, #tpu.memory_space<vmem>>, vector<16x1xf32>
      %c0_48 = arith.constant 0 : index
      %c1 = arith.constant 1 : index
      %72 = vector.load %arg6[%c0_48, %c1] : memref<16x2xf32, #tpu.memory_space<vmem>>, vector<16x1xf32>
      tpu.vector_store %arg6[%c0_48, %c1], %71 {strides = array<i32>} : memref<16x2xf32, #tpu.memory_space<vmem>>, vector<16x1xf32>,
    } else {
    }
    return
  }
  func.func @transform_0(%arg0: i32, %arg1: i32) -> (i32, i32) {
    %c0_i32 = arith.constant 0 : i32
    %c0_i32_0 = arith.constant 0 : i32
    return %arg0, %c0_i32 : i32, i32
  }
  func.func @transform_1(%arg0: i32, %arg1: i32) -> (i32, i32) {
    %c0_i32 = arith.constant 0 : i32
    %c0_i32_0 = arith.constant 0 : i32
    return %c0_i32, %arg1 : i32, i32
  }
  func.func @transform_2(%arg0: i32, %arg1: i32) -> (i32, i32) {
    %c0_i32 = arith.constant 0 : i32
    %c0_i32_0 = arith.constant 0 : i32
    return %arg0, %c0_i32 : i32, i32
  }
  func.func @transform_3(%arg0: i32, %arg1: i32) -> (i32, i32) {
    %c0_i32 = arith.constant 0 : i32
    %c0_i32_0 = arith.constant 0 : i32
    return %arg1, %c0_i32 : i32, i32
  }
  func.func @transform_4(%arg0: i32, %arg1: i32) -> (i32, i32) {
    %c0_i32 = arith.constant 0 : i32
    %c0_i32_0 = arith.constant 0 : i32
    return %arg0, %c0_i32 : i32, i32
  }
}

</mosaic_0001>

<llo_original>
// kernel: tpu_custom_call.1
$region0: #{tpu_custom_call.1}
  #allocation0 [shape = 'u32[]', space=smem, size = 0x4, offset = 0x4, fixed_abs, tag = 'smem constant byte address 0x4 - core index']
  #allocation1 [shape = 'u32[144,128]{1,0:T(1,128)}', space=vmem, size = 0x12000, scoped, tag = 'internal scratch']
  #allocation2 [shape = 'f32[16,1]{1,0:T(8,128)}', space=vmem, size = 0x2000, scoped, tag = 'scratch operand']
  #allocation3 [shape = 'f32[16,1]{1,0:T(8,128)}', space=vmem, size = 0x2000, scoped, tag = 'scratch operand']
  #allocation4 [shape = 'f32[16,1]{1,0:T(8,128)}', space=vmem, size = 0x2000, scoped, tag = 'scratch operand']
  #allocation5 [shape = 'f32[16,1]{1,0:T(8,128)}', space=vmem, size = 0x2000, scoped, tag = 'scratch operand']
  %s0 = inlined_call_operand.vmem [shape: s32[16,1], index: 0, kind: input, shape index: {}]
  %s1 = inlined_call_operand.vmem [shape: s32[1,128], index: 1, kind: input, shape index: {}]
  %s2 = inlined_call_operand.vmem [shape: f32[16,128], index: 2, kind: input, shape index: {}]
  %s3 = inlined_call_operand.hbm [shape: f32[128,128], index: 3, kind: input, shape index: {}]
  %s4 = inlined_call_operand.vmem [shape: f32[16,2], index: 4, kind: output, shape index: {}]
  %s5 = sld [smem:[#allocation0]]
  $region38: #{tpu_custom_call.1} parent=0
    _
  %s7 = ssub.s32 1, %s5
  %s8 = scalar_select 0, %s7, %s5
  $region1: #{tpu_custom_call.1} parent=0
    #allocation6 [shape = 'u8[65536]{0}', space=vmem, size = 0x10000, scoped, tag = 'input window, operand 3, single buffered']
    #allocation7 [shape = 's32[1]{0}', space=sflag, size = 0x4, scoped, tag = 'scoped memory for tpu_custom_call.1']
    %9 = vsyncpa [#allocation7], 0
    // Predicated region
    $region2: #{tpu_custom_call.1} parent=1 // pred_check
      _
    $region3: #{tpu_custom_call.1} parent=1 // pred_check_branch
      %11 = sbr.rel (0) target = $region5
    $region4: #{tpu_custom_call.1} parent=1 // pred_region
      _
    $region5: #{tpu_custom_call.1} parent=1 // pred_fallthru
      _
    // Predicated region
    $region6: #{tpu_custom_call.1} parent=1 // pred_check
      _
    $region7: #{tpu_custom_call.1} parent=1 // pred_check_branch
      %13 = sbr.rel (0) target = $region9
    $region8: #{tpu_custom_call.1} parent=1 // pred_region
      _
    $region9: #{tpu_custom_call.1} parent=1 // pred_fallthru
      _
    // Predicated region
    $region10: #{tpu_custom_call.1} parent=1 // pred_check
      _
    $region11: #{tpu_custom_call.1} parent=1 // pred_check_branch
      %15 = sbr.rel (0) target = $region13
    $region12: #{tpu_custom_call.1} parent=1 // pred_region
      _
    $region13: #{tpu_custom_call.1} parent=1 // pred_fallthru
      _
    // Predicated region
    $region14: #{tpu_custom_call.1} parent=1 // pred_check
      _
    $region15: #{tpu_custom_call.1} parent=1 // pred_check_branch
      %17 = sbr.rel (0) target = $region17
    $region16: #{tpu_custom_call.1} parent=1 // pred_region
      %s19 = ssub.s32 2048, 2048
      %20 = vsyncadd [#allocation7], %s19
      %s21 = sshll.u32 [#allocation6], 4
      %s22 = int_to_ptr.vmem [resolvable:$true] %s21
      %27 = dma.hbm_to_vmem [thread:$0]  %s3, 2048, %s22, [#allocation7], 128, 128, 8
    $region17: #{tpu_custom_call.1} parent=1 // pred_fallthru
      _
    // Predicated region
    $region18: #{tpu_custom_call.1} parent=1 // pred_check
      _
    $region19: #{tpu_custom_call.1} parent=1 // pred_check_branch
      %29 = sbr.rel (0) target = $region21
    $region20: #{tpu_custom_call.1} parent=1 // pred_region
      %30 = dma.done [#allocation7], 2048
    $region21: #{tpu_custom_call.1} parent=1 // pred_fallthru
      _
    %p31 = scmp.eq.s32.totalorder 0, 0
    // Predicated region
    $region22: #{tpu_custom_call.1} parent=1 // pred_check
      %p32 = pneg %p31
    $region23: #{tpu_custom_call.1} parent=1 // pred_check_branch
      %34 = sbr.rel (%p32) target = $region25
    $region24: #{tpu_custom_call.1} parent=1 // pred_region
      %vm35 = vcmask 7168
      %36 = vst.msk [vmem:[#allocation2] sm:$0xff] %vm35, -1e+30
      %37 = vst.msk [vmem:[#allocation2 + $0x8] sm:$0xff] %vm35, -1e+30
      %38 = vst.msk [vmem:[#allocation3] sm:$0xff] %vm35, 0.0
      %39 = vst.msk [vmem:[#allocation3 + $0x8] sm:$0xff] %vm35, 0.0
      %40 = vst.msk [vmem:[#allocation4] sm:$0xff] %vm35, 0.0
      %41 = vst.msk [vmem:[#allocation4 + $0x8] sm:$0xff] %vm35, 0.0
      %42 = vst.msk [vmem:[#allocation5] sm:$0xff] %vm35, 0.0
      %43 = vst.msk [vmem:[#allocation5 + $0x8] sm:$0xff] %vm35, 0.0
    $region25: #{tpu_custom_call.1} parent=1 // pred_fallthru
      _
    %v44 = vld [vmem:[%s2] sm:$0xff]
    %v45 = vld [vmem:[%s2 + $0x8] sm:$0xff]
    %v46 = vld [vmem:[#allocation6] sm:$0xff]
    %v47 = vld [vmem:[#allocation6 + $0x8] sm:$0xff]
    %v48 = vld [vmem:[#allocation6 + $0x10] sm:$0xff]
    %v49 = vld [vmem:[#allocation6 + $0x18] sm:$0xff]
    %v50 = vld [vmem:[#allocation6 + $0x20] sm:$0xff]
    %v51 = vld [vmem:[#allocation6 + $0x28] sm:$0xff]
    %v52 = vld [vmem:[#allocation6 + $0x30] sm:$0xff]
    %v53 = vld [vmem:[#allocation6 + $0x38] sm:$0xff]
    %v54 = vld [vmem:[#allocation6 + $0x40] sm:$0xff]
    %v55 = vld [vmem:[#allocation6 + $0x48] sm:$0xff]
    %v56 = vld [vmem:[#allocation6 + $0x50] sm:$0xff]
    %v57 = vld [vmem:[#allocation6 + $0x58] sm:$0xff]
    %v58 = vld [vmem:[#allocation6 + $0x60] sm:$0xff]
    %v59 = vld [vmem:[#allocation6 + $0x68] sm:$0xff]
    %v60 = vld [vmem:[#allocation6 + $0x70] sm:$0xff]
    %v61 = vld [vmem:[#allocation6 + $0x78] sm:$0xff]
    %62 = vmatprep.subr.mxu0 0.0
    %63 = vmatpush1.xpose.msra.mxu0 %v46
    %64 = vmatprep.subr.mxu0 0.0
    %65 = vmatpush1.xpose.msra.mxu0 %v47
    %66 = vmatprep.subr.mxu0 0.0
    %67 = vmatpush1.xpose.msra.mxu0 %v48
    %68 = vmatprep.subr.mxu0 0.0
    %69 = vmatpush1.xpose.msra.mxu0 %v49
    %70 = vmatprep.subr.mxu0 0.0
    %71 = vmatpush1.xpose.msra.mxu0 %v50
    %72 = vmatprep.subr.mxu0 0.0
    %73 = vmatpush1.xpose.msra.mxu0 %v51
    %74 = vmatprep.subr.mxu0 0.0
    %75 = vmatpush1.xpose.msra.mxu0 %v52
    %76 = vmatprep.subr.mxu0 0.0
    %77 = vmatpush1.xpose.msra.mxu0 %v53
    %78 = vmatprep.subr.mxu0 0.0
    %79 = vmatpush1.xpose.msra.mxu0 %v54
    %80 = vmatprep.subr.mxu0 0.0
    %81 = vmatpush1.xpose.msra.mxu0 %v55
    %82 = vmatprep.subr.mxu0 0.0
    %83 = vmatpush1.xpose.msra.mxu0 %v56
    %84 = vmatprep.subr.mxu0 0.0
    %85 = vmatpush1.xpose.msra.mxu0 %v57
    %86 = vmatprep.subr.mxu0 0.0
    %87 = vmatpush1.xpose.msra.mxu0 %v58
    %88 = vmatprep.subr.mxu0 0.0
    %89 = vmatpush1.xpose.msra.mxu0 %v59
    %90 = vmatprep.subr.mxu0 0.0
    %91 = vmatpush1.xpose.msra.mxu0 %v60
    %92 = vmatprep.subr.mxu0 0.0
    %93 = vmatpush1.xpose.msra.mxu0 %v61
    %94 = vmatprep.subr.mxu0 0.0
    %95 = vmatpush1.xpose.msra.mxu0 0.0
    %96 = vmatprep.subr.mxu0 0.0
    %97 = vmatpush1.xpose.msra.mxu0 0.0
    %98 = vmatprep.subr.mxu0 0.0
    %99 = vmatpush1.xpose.msra.mxu0 0.0
    %100 = vmatprep.subr.mxu0 0.0
    %101 = vmatpush1.xpose.msra.mxu0 0.0
    %102 = vmatprep.subr.mxu0 0.0
    %103 = vmatpush1.xpose.msra.mxu0 0.0
    %104 = vmatprep.subr.mxu0 0.0
    %105 = vmatpush1.xpose.msra.mxu0 0.0
    %106 = vmatprep.subr.mxu0 0.0
    %107 = vmatpush1.xpose.msra.mxu0 0.0
    %108 = vmatprep.subr.mxu0 0.0
    %109 = vmatpush1.xpose.msra.mxu0 0.0
    %110 = vmatprep.subr.mxu0 0.0
    %111 = vmatpush1.xpose.msra.mxu0 0.0
    %112 = vmatprep.subr.mxu0 0.0
    %113 = vmatpush1.xpose.msra.mxu0 0.0
    %114 = vmatprep.subr.mxu0 0.0
    %115 = vmatpush1.xpose.msra.mxu0 0.0
    %116 = vmatprep.subr.mxu0 0.0
    %117 = vmatpush1.xpose.msra.mxu0 0.0
    %118 = vmatprep.subr.mxu0 0.0
    %119 = vmatpush1.xpose.msra.mxu0 0.0
    %120 = vmatprep.subr.mxu0 0.0
    %121 = vmatpush1.xpose.msra.mxu0 0.0
    %122 = vmatprep.subr.mxu0 0.0
    %123 = vmatpush1.xpose.msra.mxu0 0.0
    %124 = vmatprep.subr.mxu0 0.0
    %125 = vmatpush1.xpose.msra.mxu0 0.0
    %126 = vmatprep.mubr.f32.mxu0 0.0
    %127 = vmatmul.mubr.f32.gmra.mrb[0].mxu0 %v44
    %v128 = vpop.f32.mrb[0].mxu0
    %v129 = vadd.f32 0.0, %v128
    %v130 = vpop.f32.mrb[0].mxu0
    %131 = vmatprep.mubr.f32.mxu0 0.0
    %132 = vmatmul.mubr.f32.gmra.mrb[0].mxu0 %v45
    %v133 = vpop.f32.mrb[0].mxu0
    %v134 = vadd.f32 0.0, %v133
    %v135 = vpop.f32.mrb[0].mxu0
    %136 = vdwg.mxu0
    %v137 = vmul.f32 %v129, 14.285714
    %v138 = vmul.f32 %v134, 14.285714
    %s139 = smul.u32 0, 16
    %v140 = vlaneseq
    %v141 = vshrl.u32 %v140, 7
    %v142 = vadd.s32 %v141, 8
    %v143 = vstv %s139
    %v144 = vadd.s32 %v143, %v141
    %v145 = vadd.s32 %v143, %v142
    %s146 = smul.u32 0, 128
    %v147 = vlaneseq
    %v148 = vand.u32 %v147, 127
    %v149 = vstv %s146
    %v150 = vadd.s32 %v149, %v148
    %vm151 = vcmp.ne.s32.totalorder %v144, %v150
    %vm152 = vcmp.ne.s32.totalorder %v145, %v150
    %vm153 = vcmp.lt.s32.totalorder %v150, 16
    %vm154 = vmand %vm151, %vm153
    %vm155 = vmand %vm152, %vm153
    %v156 = vsel %vm154, %v137, -1e+30
    %v157 = vsel %vm155, %v138, -1e+30
    %v158 = vld [vmem:[#allocation2] sm:$0xff]
    %v159 = vld [vmem:[#allocation2 + $0x8] sm:$0xff]
    %160 = vmax.xlane.f32.xlu0 %v156
    %v161 = vpop.xlane.xlu0 %160
    %162 = vmax.xlane.f32.xlu0 %v157
    %v163 = vpop.xlane.xlu0 %162
    %v164 = vmax.f32 %v158, %v161
    %v165 = vmax.f32 %v159, %v163
    %v166 = vsub.f32 %v158, %v164
    %v167 = vsub.f32 %v159, %v165
    %v168 = vmul.f32 %v166, 1.442695
    %v169 = vpow.pop %v168
    %v170 = vmul.f32 %v167, 1.442695
    %v171 = vpow.pop %v170
    %v172 = vld [vmem:[#allocation3] sm:$0xff]
    %v173 = vld [vmem:[#allocation3 + $0x8] sm:$0xff]
    %v174 = vmul.f32 %v169, %v172
    %v175 = vmul.f32 %v171, %v173
    %177 = vset.pattern.permute.xlu0 0
    %178 = vperm.xlu0 %177, %v164
    %v179 = vpop.permute.xlu0 %178
    %182 = vset.pattern.permute.xlu0 0
    %183 = vperm.xlu0 %182, %v165
    %v184 = vpop.permute.xlu0 %183
    %v186 = vsub.f32 %v156, %v179
    %v187 = vsub.f32 %v157, %v184
    %v188 = vmul.f32 %v186, 1.442695
    %v189 = vpow.pop %v188
    %v190 = vmul.f32 %v187, 1.442695
    %v191 = vpow.pop %v190
    %192 = vadd.xlane.f32.xlu0 %v189
    %v193 = vpop.xlane.xlu0 %192
    %194 = vadd.xlane.f32.xlu0 %v191
    %v195 = vpop.xlane.xlu0 %194
    %v196 = vadd.f32 %v174, %v193
    %v197 = vadd.f32 %v175, %v195
    %vm198 = vcmask 7168
    %199 = vst.msk [vmem:[#allocation3] sm:$0xff] %vm198, %v196
    %200 = vst.msk [vmem:[#allocation3 + $0x8] sm:$0xff] %vm198, %v197
    %201 = vst.msk [vmem:[#allocation2] sm:$0xff] %vm198, %v164
    %202 = vst.msk [vmem:[#allocation2 + $0x8] sm:$0xff] %vm198, %v165
    %v203 = vld [vmem:[%s0] sm:$0xff]
    %v204 = vld [vmem:[%s0 + $0x8] sm:$0xff]
    %v205 = vld [vmem:[%s1] sm:$0x1]
    %206 = vset.pattern.permute.xlu0 0
    %207 = vperm.xlu0 %206, %v203
    %v208 = vpop.permute.xlu0 %207
    %209 = vset.pattern.permute.xlu0 0
    %210 = vperm.xlu0 %209, %v204
    %v211 = vpop.permute.xlu0 %210
    %v212 = vlaneseq
    %v213 = vshrl.u32 %v212, 7
    %v214 = vsub.s32 0, %v213
    %v215 = vrot.slane %v205, %v214
    %vm216 = vcmp.eq.s32.totalorder %v208, %v215
    %vm217 = vcmp.eq.s32.totalorder %v211, %v215
    %vm218 = vmand %vm154, %vm216
    %vm219 = vmand %vm155, %vm217
    %v220 = vld [vmem:[#allocation4] sm:$0xff]
    %v221 = vld [vmem:[#allocation4 + $0x8] sm:$0xff]
    %v222 = vsel %vm218, %v137, 0.0
    %v223 = vsel %vm219, %v138, 0.0
    %224 = vadd.xlane.f32.xlu0 %v222
    %v225 = vpop.xlane.xlu0 %224
    %226 = vadd.xlane.f32.xlu0 %v223
    %v227 = vpop.xlane.xlu0 %226
    %v228 = vadd.f32 %v220, %v225
    %v229 = vadd.f32 %v221, %v227
    %230 = vst.msk [vmem:[#allocation4] sm:$0xff] %vm198, %v228
    %231 = vst.msk [vmem:[#allocation4 + $0x8] sm:$0xff] %vm198, %v229
    %v232 = vld [vmem:[#allocation5] sm:$0xff]
    %v233 = vld [vmem:[#allocation5 + $0x8] sm:$0xff]
    %v234 = vsel %vm218, 1.0, 0.0
    %v235 = vsel %vm219, 1.0, 0.0
    %236 = vadd.xlane.f32.xlu0 %v234
    %v237 = vpop.xlane.xlu0 %236
    %238 = vadd.xlane.f32.xlu0 %v235
    %v239 = vpop.xlane.xlu0 %238
    %v240 = vadd.f32 %v232, %v237
    %v241 = vadd.f32 %v233, %v239
    %242 = vst.msk [vmem:[#allocation5] sm:$0xff] %vm198, %v240
    %243 = vst.msk [vmem:[#allocation5 + $0x8] sm:$0xff] %vm198, %v241
    // Predicated region
    $region26: #{tpu_custom_call.1} parent=1 // pred_check
      %p244 = pneg %p31
    $region27: #{tpu_custom_call.1} parent=1 // pred_check_branch
      %246 = sbr.rel (%p244) target = $region29
    $region28: #{tpu_custom_call.1} parent=1 // pred_region
      %v247 = vld [vmem:[#allocation2] sm:$0xff]
      %v248 = vld [vmem:[#allocation2 + $0x8] sm:$0xff]
      %v249 = vld [vmem:[#allocation3] sm:$0xff]
      %v250 = vld [vmem:[#allocation3 + $0x8] sm:$0xff]
      %v251 = vlog2.pop %v249
      %v252 = vmul.f32 %v251, 0.6931472
      %v253 = vlog2.pop %v250
      %v254 = vmul.f32 %v253, 0.6931472
      %v255 = vadd.f32 %v247, %v252
      %v256 = vadd.f32 %v248, %v254
      %v257 = vld [vmem:[#allocation4] sm:$0xff]
      %v258 = vld [vmem:[#allocation4 + $0x8] sm:$0xff]
      %v259 = vld [vmem:[#allocation5] sm:$0xff]
      %v260 = vld [vmem:[#allocation5 + $0x8] sm:$0xff]
      %v261 = vmul.f32 %v255, %v259
      %v262 = vmul.f32 %v256, %v260
      %v263 = vsub.f32 %v257, %v261
      %v264 = vsub.f32 %v258, %v262
      %265 = vst.msk [vmem:[%s4] sm:$0xff] %vm198, %v263
      %266 = vst.msk [vmem:[%s4 + $0x8] sm:$0xff] %vm198, %v264
      %v267 = vld [vmem:[#allocation5] sm:$0xff]
      %v268 = vld [vmem:[#allocation5 + $0x8] sm:$0xff]
      %271 = vrot.lane.b32.xlu0 %v267, 1
      %v272 = vpop.permute.xlu0 %271
      %273 = vrot.lane.b32.xlu0 %v268, 1
      %v274 = vpop.permute.xlu0 %273
      %vm277 = vcmask 15368
      %278 = vst.msk [vmem:[%s4] sm:$0xff] %vm277, %v272
      %279 = vst.msk [vmem:[%s4 + $0x8] sm:$0xff] %vm277, %v274
    $region29: #{tpu_custom_call.1} parent=1 // pred_fallthru
      _
    // Predicated region
    $region30: #{tpu_custom_call.1} parent=1 // pred_check
      _
    $region31: #{tpu_custom_call.1} parent=1 // pred_check_branch
      %281 = sbr.rel (0) target = $region33
    $region32: #{tpu_custom_call.1} parent=1 // pred_region
      _
    $region33: #{tpu_custom_call.1} parent=1 // pred_fallthru
      _
    // Predicated region
    $region34: #{tpu_custom_call.1} parent=1 // pred_check
      _
    $region35: #{tpu_custom_call.1} parent=1 // pred_check_branch
      %283 = sbr.rel (0) target = $region37
    $region36: #{tpu_custom_call.1} parent=1 // pred_region
      _
    $region37: #{tpu_custom_call.1} parent=1 // pred_fallthru
      _
    %284 = vsyncpa [#allocation7], 1

</llo_original>
